<compile_context>
chip_gen: v7x
topology: tpu7x:2x2x1
jax: 0.10.0
libtpu: 0.0.40
codegen_flags: <defaults>
</compile_context>

<pallas_src>
import functools

import jax
import jax.numpy as jnp
from jax.experimental import pallas as pl
from jax.experimental.pallas import tpu as pltpu


def _adaln_kernel(domain_ids_ref, x_ref, gamma_ref, beta_ref, o_ref, *, eps):
    # domain_ids live in SMEM purely to drive the gamma/beta index_maps; the
    # body never needs them.
    del domain_ids_ref

    x = x_ref[...].astype(jnp.float32)                    # (TS, H)

    # LayerNorm over the last (lane) dim. Two-pass variance = torch's
    # var(unbiased=False); numerically robust for large-offset activations.
    mean = jnp.mean(x, axis=-1, keepdims=True)            # (TS, 1)
    centered = x - mean
    var = jnp.mean(centered * centered, axis=-1, keepdims=True)
    x_norm = centered * jax.lax.rsqrt(var + eps)          # rsqrt -> EUP slot

    g = gamma_ref[...].astype(jnp.float32)                # (1, H)
    b = beta_ref[...].astype(jnp.float32)                 # (1, H)
    o_ref[...] = (g * x_norm + b).astype(o_ref.dtype)


def _pick_seq_tile(seq_len, hidden, itemsize):
    """Largest seq tile (multiple of 8) whose x slab stays <= ~4 MiB.

    Sized so double-buffered input + output tiles plus f32 temporaries stay
    well under the scoped-VMEM limit on every generation (v5e 16 MiB default,
    v7x 64 MiB physical)."""
    budget_bytes = 4 * 1024 * 1024
    cap = budget_bytes // max(1, hidden * itemsize)
    cap = max(8, min(1024, (cap // 8) * 8))
    if seq_len <= cap:
        return seq_len                     # full-extent block: always legal
    for ts in range(cap, 7, -8):           # prefer a tile that divides S
        if seq_len % ts == 0:
            return ts
    return cap                             # ragged last tile; Pallas masks it


def adaptive_layer_norm(x, gamma, beta, domain_ids=None, eps=1e-5, seq_tile=None):
    """x: [B, S, H]; gamma/beta: [num_domains, H]; domain_ids: [B] int or None."""
    B, S, H = x.shape
    num_domains = gamma.shape[0]

    if domain_ids is None:
        domain_ids = jnp.zeros((B,), dtype=jnp.int32)
    domain_ids = domain_ids.astype(jnp.int32)

    # TODO(synk): for production, pad H to a multiple of 128 on the wrapper
    # side so stores are lane-dense (unmasked vst); small H here equals the
    # full array dim so it still compiles (masked stores only).
    if seq_tile is None:
        TS = _pick_seq_tile(S, H, x.dtype.itemsize)
    else:
        TS = min(int(seq_tile), S)

    # Present gamma/beta as (num_domains, 1, H): the per-batch domain row is
    # then gathered entirely by the BlockSpec index_map (scalar-prefetched
    # domain_ids), and the last two block dims equal the full array dims.
    gamma3 = gamma.reshape(num_domains, 1, H)
    beta3 = beta.reshape(num_domains, 1, H)

    kernel = functools.partial(_adaln_kernel, eps=eps)
    grid = (B, pl.cdiv(S, TS))

    return pl.pallas_call(
        kernel,
        out_shape=jax.ShapeDtypeStruct((B, S, H), x.dtype),
        grid_spec=pltpu.PrefetchScalarGridSpec(
            num_scalar_prefetch=1,              # domain_ids -> SMEM
            grid=grid,
            in_specs=[
                # x: (TS, H) tile per (batch, seq-tile); batch dim squeezed.
                pl.BlockSpec((None, TS, H), lambda b, s, dids: (b, s, 0)),
                # gamma/beta: only the (1, H) row for this batch's domain; the
                # row is re-DMA'd only when the block index actually changes.
                pl.BlockSpec((None, 1, H), lambda b, s, dids: (dids[b], 0, 0)),
                pl.BlockSpec((None, 1, H), lambda b, s, dids: (dids[b], 0, 0)),
            ],
            out_specs=pl.BlockSpec((None, TS, H), lambda b, s, dids: (b, s, 0)),
        ),
        compiler_params=pltpu.CompilerParams(
            # Pure map over both axes -> v7x can shard (B, S/TS) across 2 TCs.
            dimension_semantics=("parallel", "parallel"),
            # Tiles are sized for <= ~16-24 MiB live; 48 MiB keeps double
            # buffering alive on v5e/v6e and leaves headroom on v7x's 64 MiB.
            vmem_limit_bytes=48 * 1024 * 1024,
        ),
    )(domain_ids, x, gamma3, beta3)


def adaptive_layer_norm_ref(x, gamma, beta, domain_ids=None, eps=1e-5):
    """Pure-JAX reference mirroring the PyTorch forward."""
    B, S, H = x.shape
    if domain_ids is None:
        domain_ids = jnp.zeros((B,), dtype=jnp.int32)
    mean = jnp.mean(x, axis=-1, keepdims=True)
    var = jnp.mean((x - mean) ** 2, axis=-1, keepdims=True)
    x_norm = (x - mean) / jnp.sqrt(var + eps)
    g = gamma[domain_ids][:, None, :]   # (B, 1, H)
    b = beta[domain_ids][:, None, :]
    return g * x_norm + b


if __name__ == "__main__":
    B, S, H = 2, 8, 32
    num_domains = 2
    eps = 1e-5

    key = jax.random.PRNGKey(0)
    kx, kg, kb, kd = jax.random.split(key, 4)

    x = jax.random.normal(kx, (B, S, H), dtype=jnp.float32)
    # Module initializes gamma=ones, beta=zeros; perturb deterministically so
    # the domain gather is actually exercised.
    gamma = jnp.ones((num_domains, H), jnp.float32) + 0.1 * jax.random.normal(
        kg, (num_domains, H), dtype=jnp.float32
    )
    beta = 0.1 * jax.random.normal(kb, (num_domains, H), dtype=jnp.float32)
    domain_ids = jax.random.randint(kd, (B,), 0, num_domains, dtype=jnp.int32)

    out = jax.block_until_ready(adaptive_layer_norm(x, gamma, beta, domain_ids, eps=eps))
    ref = adaptive_layer_norm_ref(x, gamma, beta, domain_ids, eps=eps)
    assert out.shape == (B, S, H)
    assert jnp.allclose(out, ref, atol=1e-5, rtol=1e-5), (
        f"max abs err {jnp.max(jnp.abs(out - ref))}"
    )

    # domain_ids=None default path (domain 0 for every batch element).
    out0 = jax.block_until_ready(adaptive_layer_norm(x, gamma, beta, None, eps=eps))
    ref0 = adaptive_layer_norm_ref(x, gamma, beta, None, eps=eps)
    assert jnp.allclose(out0, ref0, atol=1e-5, rtol=1e-5)

    # Exercise the multi-tile seq path (grid=(B, S/TS) with TS < S) and the
    # per-seq-tile gamma/beta row reuse.
    S2 = 32
    x2 = jax.random.normal(kx, (B, S2, H), dtype=jnp.float32)
    out2 = jax.block_until_ready(
        adaptive_layer_norm(x2, gamma, beta, domain_ids, eps=eps, seq_tile=8)
    )
    ref2 = adaptive_layer_norm_ref(x2, gamma, beta, domain_ids, eps=eps)
    assert jnp.allclose(out2, ref2, atol=1e-5, rtol=1e-5), (
        f"max abs err (tiled seq) {jnp.max(jnp.abs(out2 - ref2))}"
    )

    print("KERNEL_OK")
</pallas_src>

<mosaic_0001>
module attributes {stable_mosaic.version = 11 : i64} {
  func.func @_adaln_kernel(%arg0: i32, %arg1: i32, %arg2: memref<2xi32, #tpu.memory_space<smem>>, %arg3: memref<1x8x32xf32, #tpu.memory_space<vmem>>, %arg4: memref<1x1x32xf32, #tpu.memory_space<vmem>>, %arg5: memref<1x1x32xf32, #tpu.memory_space<vmem>>, %arg6: memref<1x8x32xf32, #tpu.memory_space<vmem>>) attributes {dimension_semantics = [#tpu.dimension_semantics<parallel>, #tpu.dimension_semantics<parallel>], iteration_bounds = array<i64: 2, 1>, scalar_prefetch = 1 : i64, scratch_operands = 0 : i64, tpu.core_type = #tpu.core_type<tc>, window_params = [{transform_indices = @transform_0, window_bounds = array<i64: 1, 8, 32>}, {transform_indices = @transform_1, window_bounds = array<i64: 1, 1, 32>}, {transform_indices = @transform_2, window_bounds = array<i64: 1, 1, 32>}, {transform_indices = @transform_3, window_bounds = array<i64: 1, 8, 32>}]} {
    %c0 = arith.constant 0 : index
    %c0_0 = arith.constant 0 : index
    %c0_1 = arith.constant 0 : index
    %0 = vector.load %arg3[%c0, %c0_0, %c0_1] : memref<1x8x32xf32, #tpu.memory_space<vmem>>, vector<1x8x32xf32>
    %1 = vector.shape_cast %0 : vector<1x8x32xf32> to vector<8x32xf32>
    %cst = arith.constant dense<0.000000e+00> : vector<8xf32>
    %2 = vector.multi_reduction <add>, %1, %cst [1] : vector<8x32xf32> to vector<8xf32>
    %3 = vector.shape_cast %2 : vector<8xf32> to vector<8x1xf32>
    %cst_2 = arith.constant 3.200000e+01 : f32
    %4 = vector.broadcast %cst_2 : f32 to vector<8x1xf32>
    %5 = arith.divf %3, %4 : vector<8x1xf32>
    %6 = vector.broadcast %5 : vector<8x1xf32> to vector<8x32xf32>
    %7 = arith.subf %1, %6 : vector<8x32xf32>
    %8 = arith.mulf %7, %7 : vector<8x32xf32>
    %cst_3 = arith.constant dense<0.000000e+00> : vector<8xf32>
    %9 = vector.multi_reduction <add>, %8, %cst_3 [1] : vector<8x32xf32> to vector<8xf32>
    %10 = vector.shape_cast %9 : vector<8xf32> to vector<8x1xf32>
    %cst_4 = arith.constant 3.200000e+01 : f32
    %11 = vector.broadcast %cst_4 : f32 to vector<8x1xf32>
    %12 = arith.divf %10, %11 : vector<8x1xf32>
    %cst_5 = arith.constant 9.99999974E-6 : f32
    %13 = vector.broadcast %cst_5 : f32 to vector<8x1xf32>
    %14 = arith.addf %12, %13 : vector<8x1xf32>
    %15 = math.rsqrt %14 : vector<8x1xf32>
    %16 = vector.broadcast %15 : vector<8x1xf32> to vector<8x32xf32>
    %17 = arith.mulf %7, %16 : vector<8x32xf32>
    %c0_6 = arith.constant 0 : index
    %c0_7 = arith.constant 0 : index
    %c0_8 = arith.constant 0 : index
    %18 = vector.load %arg4[%c0_6, %c0_7, %c0_8] : memref<1x1x32xf32, #tpu.memory_space<vmem>>, vector<1x1x32xf32>
    %19 = vector.shape_cast %18 : vector<1x1x32xf32> to vector<1x32xf32>
    %c0_9 = arith.constant 0 : index
    %c0_10 = arith.constant 0 : index
    %c0_11 = arith.constant 0 : index
    %20 = vector.load %arg5[%c0_9, %c0_10, %c0_11] : memref<1x1x32xf32, #tpu.memory_space<vmem>>, vector<1x1x32xf32>
    %21 = vector.shape_cast %20 : vector<1x1x32xf32> to vector<1x32xf32>
    %22 = vector.broadcast %19 : vector<1x32xf32> to vector<8x32xf32>
    %23 = arith.mulf %22, %17 : vector<8x32xf32>
    %24 = vector.broadcast %21 : vector<1x32xf32> to vector<8x32xf32>
    %25 = arith.addf %23, %24 : vector<8x32xf32>
    %c0_12 = arith.constant 0 : index
    %c0_13 = arith.constant 0 : index
    %c0_14 = arith.constant 0 : index
    %26 = vector.load %arg6[%c0_12, %c0_13, %c0_14] : memref<1x8x32xf32, #tpu.memory_space<vmem>>, vector<1x8x32xf32>
    %27 = vector.shape_cast %26 : vector<1x8x32xf32> to vector<8x32xf32>
    %28 = vector.shape_cast %25 : vector<8x32xf32> to vector<1x8x32xf32>
    tpu.vector_store %arg6[%c0_12, %c0_13, %c0_14], %28 {strides = array<i32>} : memref<1x8x32xf32, #tpu.memory_space<vmem>>, vector<1x8x32xf32>,
    return
  }
  func.func @transform_0(%arg0: i32, %arg1: i32, %arg2: memref<2xi32, #tpu.memory_space<smem>>) -> (i32, i32, i32) {
    %c0_i32 = arith.constant 0 : i32
    %c0_i32_0 = arith.constant 0 : i32
    return %arg0, %arg1, %c0_i32 : i32, i32, i32
  }
  func.func @transform_1(%arg0: i32, %arg1: i32, %arg2: memref<2xi32, #tpu.memory_space<smem>>) -> (i32, i32, i32) {
    %0 = arith.index_cast %arg0 : i32 to index
    %1 = memref.load %arg2[%0] : memref<2xi32, #tpu.memory_space<smem>>
    %c0_i32 = arith.constant 0 : i32
    %c0_i32_0 = arith.constant 0 : i32
    %c0_i32_1 = arith.constant 0 : i32
    return %1, %c0_i32, %c0_i32_0 : i32, i32, i32
  }
  func.func @transform_2(%arg0: i32, %arg1: i32, %arg2: memref<2xi32, #tpu.memory_space<smem>>) -> (i32, i32, i32) {
    %0 = arith.index_cast %arg0 : i32 to index
    %1 = memref.load %arg2[%0] : memref<2xi32, #tpu.memory_space<smem>>
    %c0_i32 = arith.constant 0 : i32
    %c0_i32_0 = arith.constant 0 : i32
    %c0_i32_1 = arith.constant 0 : i32
    return %1, %c0_i32, %c0_i32_0 : i32, i32, i32
  }
  func.func @transform_3(%arg0: i32, %arg1: i32, %arg2: memref<2xi32, #tpu.memory_space<smem>>) -> (i32, i32, i32) {
    %c0_i32 = arith.constant 0 : i32
    %c0_i32_0 = arith.constant 0 : i32
    return %arg0, %arg1, %c0_i32 : i32, i32, i32
  }
}

</mosaic_0001>

<llo_original>
// kernel: tpu_custom_call.1
$region0: #{tpu_custom_call.1}
  #allocation0 [shape = 'u32[]', space=smem, size = 0x4, offset = 0x4, fixed_abs, tag = 'smem constant byte address 0x4 - core index']
  #allocation1 [shape = 'u32[144,128]{1,0:T(1,128)}', space=vmem, size = 0x12000, scoped, tag = 'internal scratch']
  #allocation2 [shape = 's32[1]{0}', space=sflag, size = 0x4, scoped, tag = 'scoped memory for tpu_custom_call.1']
  #allocation3 [shape = 'u8[512]{0}', space=smem, size = 0x200, scoped, tag = 'prefetched SMEM operand 0']
  %s0 = inlined_call_operand.hbm [shape: s32[2], index: 0, kind: input, shape index: {}]
  %s1 = inlined_call_operand.hbm [shape: f32[2,8,32], index: 1, kind: input, shape index: {}]
  %s2 = inlined_call_operand.vmem [shape: f32[2,1,32], index: 2, kind: input, shape index: {}]
  %s3 = inlined_call_operand.vmem [shape: f32[2,1,32], index: 3, kind: input, shape index: {}]
  %s4 = inlined_call_operand.hbm [shape: f32[2,8,32], index: 4, kind: output, shape index: {}]
  %s5 = sld [smem:[#allocation0]]
  $region49: #{tpu_custom_call.1} parent=0
    _
  %s7 = ssub.s32 1, %s5
  %s8 = scalar_select 0, %s7, %s5
  %10 = dma.hbm_to_smem %s0, 16, [#allocation3], [#allocation2]
  %11 = dma.done [#allocation2], 16
  %12 = sfence
  $region1: #{tpu_custom_call.1} parent=0
    #allocation4 [shape = 'u8[8192]{0}', space=vmem, size = 0x2000, scoped, tag = 'input window, operand 1']
    #allocation5 [shape = 's32[2]{0}', space=sflag, size = 0x8, scoped, tag = 'scoped memory for tpu_custom_call.1']
    #allocation6 [shape = 's32[2]{0}', space=sflag, size = 0x8, scoped, tag = 'scoped memory for tpu_custom_call.1']
    #allocation7 [shape = 'u8[8192]{0}', space=vmem, size = 0x2000, scoped, tag = 'output window, operand 0']
    %13 = vsyncpa [#allocation5], 0
    %s14 = scalar_lea.sflag [#allocation5], 1
    %15 = vsyncpa %s14, 0
    %16 = vsyncpa [#allocation6], 0
    %s17 = scalar_lea.sflag [#allocation6], 1
    %18 = vsyncpa %s17, 0
    loop: start=0, step=1, limit=4
    $region2: #{tpu_custom_call.1} parent=1 // loop_pre_header
      _
    $region3: #{tpu_custom_call.1} parent=1 // loop_header
      %s20 = sphi 0, %s24
      %p21 = scmp.ge.s32.totalorder %s20, 4
      %s27 = sphi 0, %s39
      %s28 = sphi 0, %s35
      %s29 = sphi 0, %s27
      %s30 = sphi 0, %s28
      %s31 = sphi 0, %s29
      %s32 = sphi 0, %s30
      %s44 = sphi 0, %s46
      %s47 = sphi 0, %s44
      %s48 = sphi 0, %s47
      %s64 = sphi 0, %s48
      %s72 = sphi 0, %s74
      %s75 = sphi 0, %s72
      %s76 = sphi 0, %s75
      %s92 = sphi 0, %s76
      %s100 = sphi 0, %s102
      %s103 = sphi 0, %s100
      %s104 = sphi 0, %s103
      %s120 = sphi 0, %s104
      %s128 = sphi 0, %s130
      %s131 = sphi 0, %s128
      %s132 = sphi 0, %s131
      %s148 = sphi 0, %s132
    $region4: #{tpu_custom_call.1} parent=1 // loop_header_branch
      %23 = sbr.rel (%p21) target = $region8
    $region5: #{tpu_custom_call.1} parent=1 // loop_body
      %s25 = ssub.s32 %s20, 1
      %s26 = ssub.s32 %s20, 2
      %s33 = sadd.s32 1, %s28
      %p34 = scmp.ge.s32.totalorder %s33, 1
      %s35 = scalar_select %p34, 0, %s33
      %s36 = sadd.s32 1, %s27
      %s37 = scalar_select %p34, %s36, %s27
      %p38 = scmp.ge.s32.totalorder %s37, 2
      %s39 = scalar_select %p38, 0, %s37
      %s40 = ssub.s32 %s27, %s39
      %s41 = ssub.s32 %s28, %s35
      %s42 = sor.u32 %s40, %s41
      %p43 = scmp.eq.s32.totalorder %s42, 0
      %s45 = sadd.s32 %s44, 1
      %s46 = scalar_select %p43, %s44, %s45
      %p49 = pneg %p43
      %p50 = scmp.eq.s32.totalorder %s20, 1
      %p51 = por %p49, %p50
      %p52 = scmp.ne.s32.totalorder %s44, %s47
      %p53 = scmp.eq.s32.totalorder %s20, 0
      %p54 = por %p52, %p53
      %p55 = scmp.ne.s32.totalorder %s44, %s47
      %p56 = scmp.eq.s32.totalorder %s25, 1
      %p57 = por %p55, %p56
      %p58 = scmp.ne.s32.totalorder %s47, %s48
      %p59 = scmp.eq.s32.totalorder %s25, 0
      %p60 = por %p58, %p59
      %p61 = scmp.ne.s32.totalorder %s47, %s48
      %p62 = scmp.eq.s32.totalorder %s26, 1
      %p63 = por %p61, %p62
      %p65 = scmp.ne.s32.totalorder %s48, %s64
      %p66 = scmp.eq.s32.totalorder %s26, 0
      %p67 = por %p65, %p66
      %s68 = sld [smem:[#allocation3 + %s27]]
      %s69 = sld [smem:[#allocation3 + %s39]]
      %s70 = ssub.s32 %s68, %s69
      %p71 = scmp.eq.s32.totalorder %s70, 0
      %s73 = sadd.s32 %s72, 1
      %s74 = scalar_select %p71, %s72, %s73
      %p77 = pneg %p71
      %p78 = scmp.eq.s32.totalorder %s20, 1
      %p79 = por %p77, %p78
      %p80 = scmp.ne.s32.totalorder %s72, %s75
      %p81 = scmp.eq.s32.totalorder %s20, 0
      %p82 = por %p80, %p81
      %p83 = scmp.ne.s32.totalorder %s72, %s75
      %p84 = scmp.eq.s32.totalorder %s25, 1
      %p85 = por %p83, %p84
      %p86 = scmp.ne.s32.totalorder %s75, %s76
      %p87 = scmp.eq.s32.totalorder %s25, 0
      %p88 = por %p86, %p87
      %p89 = scmp.ne.s32.totalorder %s75, %s76
      %p90 = scmp.eq.s32.totalorder %s26, 1
      %p91 = por %p89, %p90
      %p93 = scmp.ne.s32.totalorder %s76, %s92
      %p94 = scmp.eq.s32.totalorder %s26, 0
      %p95 = por %p93, %p94
      %s96 = sld [smem:[#allocation3 + %s27]]
      %s97 = sld [smem:[#allocation3 + %s39]]
      %s98 = ssub.s32 %s96, %s97
      %p99 = scmp.eq.s32.totalorder %s98, 0
      %s101 = sadd.s32 %s100, 1
      %s102 = scalar_select %p99, %s100, %s101
      %p105 = pneg %p99
      %p106 = scmp.eq.s32.totalorder %s20, 1
      %p107 = por %p105, %p106
      %p108 = scmp.ne.s32.totalorder %s100, %s103
      %p109 = scmp.eq.s32.totalorder %s20, 0
      %p110 = por %p108, %p109
      %p111 = scmp.ne.s32.totalorder %s100, %s103
      %p112 = scmp.eq.s32.totalorder %s25, 1
      %p113 = por %p111, %p112
      %p114 = scmp.ne.s32.totalorder %s103, %s104
      %p115 = scmp.eq.s32.totalorder %s25, 0
      %p116 = por %p114, %p115
      %p117 = scmp.ne.s32.totalorder %s103, %s104
      %p118 = scmp.eq.s32.totalorder %s26, 1
      %p119 = por %p117, %p118
      %p121 = scmp.ne.s32.totalorder %s104, %s120
      %p122 = scmp.eq.s32.totalorder %s26, 0
      %p123 = por %p121, %p122
      %s124 = ssub.s32 %s27, %s39
      %s125 = ssub.s32 %s28, %s35
      %s126 = sor.u32 %s124, %s125
      %p127 = scmp.eq.s32.totalorder %s126, 0
      %s129 = sadd.s32 %s128, 1
      %s130 = scalar_select %p127, %s128, %s129
      %p133 = pneg %p127
      %p134 = scmp.eq.s32.totalorder %s20, 1
      %p135 = por %p133, %p134
      %p136 = scmp.ne.s32.totalorder %s128, %s131
      %p137 = scmp.eq.s32.totalorder %s20, 0
      %p138 = por %p136, %p137
      %p139 = scmp.ne.s32.totalorder %s128, %s131
      %p140 = scmp.eq.s32.totalorder %s25, 1
      %p141 = por %p139, %p140
      %p142 = scmp.ne.s32.totalorder %s131, %s132
      %p143 = scmp.eq.s32.totalorder %s25, 0
      %p144 = por %p142, %p143
      %p145 = scmp.ne.s32.totalorder %s131, %s132
      %p146 = scmp.eq.s32.totalorder %s26, 1
      %p147 = por %p145, %p146
      %p149 = scmp.ne.s32.totalorder %s132, %s148
      %p150 = scmp.eq.s32.totalorder %s26, 0
      %p151 = por %p149, %p150
      %p152 = scmp.le.s32.totalorder 1, %s20
      %p153 = scmp.lt.s32.totalorder %s20, 3
      %p154 = pnand %p152, %p153
      %p155 = pneg %p154
      // Predicated region
      $region9: #{tpu_custom_call.1} parent=5 // pred_check
        _
      $region10: #{tpu_custom_call.1} parent=5 // pred_check_branch
        %157 = sbr.rel (%p154) target = $region12
      $region11: #{tpu_custom_call.1} parent=5 // pred_region
        %s158 = ssub.s32 %s20, 1
      $region12: #{tpu_custom_call.1} parent=5 // pred_fallthru
        _
      %p159 = scmp.lt.s32.totalorder %s20, 2
      // Predicated region
      $region13: #{tpu_custom_call.1} parent=5 // pred_check
        %p160 = pneg %p159
      $region14: #{tpu_custom_call.1} parent=5 // pred_check_branch
        %162 = sbr.rel (%p160) target = $region16
      $region15: #{tpu_custom_call.1} parent=5 // pred_region
        // Predicated region
        $region17: #{tpu_custom_call.1} parent=15 // pred_check
          %p163 = pneg %p54
        $region18: #{tpu_custom_call.1} parent=15 // pred_check_branch
          %165 = sbr.rel (%p163) target = $region20
        $region19: #{tpu_custom_call.1} parent=15 // pred_region
          %s166 = sand.u32 %s44, 1
          %s167 = scalar_lea.sflag [#allocation5], %s166
          %s168 = sand.u32 %s44, 1
          %s169 = smul.addr %s168, 8
          %s170 = scalar_lea.vmem [#allocation4], %s169
          %s172 = ssub.s32 128, 128
          %173 = vsyncadd %s167, %s172
          %s174 = sadd.s32 %s28, %s27
          %s175 = smul.addr %s174, 128
          %s176 = scalar_lea.hbm %s1, %s175
          %s178 = sshll.u32 %s170, 4
          %s179 = int_to_ptr.vmem [resolvable:$true] %s178
          %181 = dma.hbm_to_vmem [thread:$0]  %s176, 128, %s179, %s167
        $region20: #{tpu_custom_call.1} parent=15 // pred_fallthru
          _
        // Predicated region
        $region21: #{tpu_custom_call.1} parent=15 // pred_check
          %p182 = pneg %p82
        $region22: #{tpu_custom_call.1} parent=15 // pred_check_branch
          %184 = sbr.rel (%p182) target = $region24
        $region23: #{tpu_custom_call.1} parent=15 // pred_region
          %s185 = sld [smem:[#allocation3 + %s27]]
          %p186 = scmp.lt.s32.totalorder %s185, 1
          %s187 = scalar_select %p186, %s185, 1
          %s188 = scalar_lea.vmem %s2, %s187
          %s189 = sld [smem:[#allocation3 + %s27]]
        $region24: #{tpu_custom_call.1} parent=15 // pred_fallthru
          _
        // Predicated region
        $region25: #{tpu_custom_call.1} parent=15 // pred_check
          %p190 = pneg %p110
        $region26: #{tpu_custom_call.1} parent=15 // pred_check_branch
          %192 = sbr.rel (%p190) target = $region28
        $region27: #{tpu_custom_call.1} parent=15 // pred_region
          %s193 = sld [smem:[#allocation3 + %s27]]
          %p194 = scmp.lt.s32.totalorder %s193, 1
          %s195 = scalar_select %p194, %s193, 1
          %s196 = scalar_lea.vmem %s3, %s195
          %s197 = sld [smem:[#allocation3 + %s27]]
        $region28: #{tpu_custom_call.1} parent=15 // pred_fallthru
          _
      $region16: #{tpu_custom_call.1} parent=5 // pred_fallthru
        _
      %p198 = scmp.le.s32.totalorder 1, %s20
      %p199 = scmp.lt.s32.totalorder %s20, 3
      %p200 = pnand %p198, %p199
      %p201 = pneg %p200
      // Predicated region
      $region29: #{tpu_custom_call.1} parent=5 // pred_check
        _
      $region30: #{tpu_custom_call.1} parent=5 // pred_check_branch
        %203 = sbr.rel (%p200) target = $region32
      $region31: #{tpu_custom_call.1} parent=5 // pred_region
        %s204 = ssub.s32 %s20, 1
        %s205 = sand.u32 %s47, 1
        %s206 = scalar_lea.sflag [#allocation5], %s205
        %s207 = sand.u32 %s47, 1
        %s208 = smul.addr %s207, 8
        %s209 = scalar_lea.vmem [#allocation4], %s208
        // Predicated region
        $region33: #{tpu_custom_call.1} parent=31 // pred_check
          %p210 = pneg %p60
        $region34: #{tpu_custom_call.1} parent=31 // pred_check_branch
          %212 = sbr.rel (%p210) target = $region36
        $region35: #{tpu_custom_call.1} parent=31 // pred_region
          %213 = dma.done %s206, 128
        $region36: #{tpu_custom_call.1} parent=31 // pred_fallthru
          _
        %s214 = sand.u32 %s47, 1
        %s215 = scalar_lea.sflag [#allocation5], %s214
        %s216 = sand.u32 %s47, 1
        %s217 = smul.addr %s216, 8
        %s218 = scalar_lea.vmem [#allocation4], %s217
        %p219 = pneg %p60
        %p220 = pneg %p57
        %s221 = sld [smem:[#allocation3 + %s29]]
        %p222 = scmp.lt.s32.totalorder %s221, 1
        %s223 = scalar_select %p222, %s221, 1
        %s224 = scalar_lea.vmem %s2, %s223
        %p225 = pneg %p88
        %p226 = pneg %p85
        %s227 = sld [smem:[#allocation3 + %s29]]
        %p228 = scmp.lt.s32.totalorder %s227, 1
        %s229 = scalar_select %p228, %s227, 1
        %s230 = scalar_lea.vmem %s3, %s229
        %p231 = pneg %p116
        %p232 = pneg %p113
        %p233 = pneg %p144
        %p234 = pneg %p141
        %s235 = sand.u32 %s131, 1
        %s236 = scalar_lea.sflag [#allocation6], %s235
        %s237 = sand.u32 %s131, 1
        %s238 = smul.addr %s237, 8
        %s239 = scalar_lea.vmem [#allocation7], %s238
        %s240 = sld [smem:[#allocation3 + %s29]]
        %p241 = scmp.lt.s32.totalorder %s240, 1
        %s242 = scalar_select %p241, %s240, 1
        %s243 = scalar_lea.vmem %s2, %s242
        %s244 = sld [smem:[#allocation3 + %s29]]
        %s245 = sld [smem:[#allocation3 + %s29]]
        %p246 = scmp.lt.s32.totalorder %s245, 1
        %s247 = scalar_select %p246, %s245, 1
        %s248 = scalar_lea.vmem %s3, %s247
        %s249 = sld [smem:[#allocation3 + %s29]]
        %v250 = vld [vmem:[%s209] sm:$0xff]
        %vm251 = vcmask 261120
        %v252 = vsel %vm251, %v250, 0.0
        %253 = vadd.xlane.f32.xlu0 %v252
        %v254 = vpop.xlane.xlu0 %253
        %v255 = vrcp.pop 32.0
        %v256 = vmul.f32 %v254, %v255
        %v257 = vsub.f32 %v250, %v256
        %v258 = vmul.f32 %v257, %v257
        %v259 = vsel %vm251, %v258, 0.0
        %260 = vadd.xlane.f32.xlu0 %v259
        %v261 = vpop.xlane.xlu0 %260
        %v262 = vmul.f32 %v261, %v255
        %v263 = vadd.f32 %v262, 1e-05
        %v264 = vrsqrt.pop %v263
        %v265 = vmul.f32 %v257, %v264
        %v266 = vld [vmem:[%s243] sm:$0x1]
        %v267 = vld [vmem:[%s248] sm:$0x1]
        %v269 = vlaneseq
        %v270 = vshrl.u32 %v269, 7
        %v271 = vsub.s32 0, %v270
        %v272 = vrot.slane %v266, %v271
        %v274 = vmul.f32 %v272, %v265
        %v276 = vlaneseq
        %v277 = vshrl.u32 %v276, 7
        %v278 = vsub.s32 0, %v277
        %v279 = vrot.slane %v267, %v278
        %v281 = vadd.f32 %v274, %v279
        %282 = vst.msk [vmem:[%s239] sm:$0xff] %vm251, %v281
        %s283 = sand.u32 %s131, 1
        %s284 = scalar_lea.sflag [#allocation6], %s283
        %s285 = sand.u32 %s131, 1
        %s286 = smul.addr %s285, 8
        %s287 = scalar_lea.vmem [#allocation7], %s286
        // Predicated region
        $region37: #{tpu_custom_call.1} parent=31 // pred_check
          %p288 = pneg %p141
        $region38: #{tpu_custom_call.1} parent=31 // pred_check_branch
          %290 = sbr.rel (%p288) target = $region40
        $region39: #{tpu_custom_call.1} parent=31 // pred_region
          %s292 = ssub.s32 128, 128
          %293 = vsyncadd %s284, %s292
          %s294 = sadd.s32 %s30, %s29
          %s295 = smul.addr %s294, 128
          %s296 = scalar_lea.hbm %s4, %s295
          %s298 = sshll.u32 %s287, 4
          %s299 = int_to_ptr.vmem [resolvable:$true] %s298
          %301 = dma.vmem_to_hbm [thread:$0]  %s299, 128, %s296, %s284
        $region40: #{tpu_custom_call.1} parent=31 // pred_fallthru
          _
      $region32: #{tpu_custom_call.1} parent=5 // pred_fallthru
        _
      %p302 = scmp.le.s32.totalorder 2, %s20
      // Predicated region
      $region41: #{tpu_custom_call.1} parent=5 // pred_check
        %p303 = pneg %p302
      $region42: #{tpu_custom_call.1} parent=5 // pred_check_branch
        %305 = sbr.rel (%p303) target = $region44
      $region43: #{tpu_custom_call.1} parent=5 // pred_region
        %s306 = ssub.s32 %s20, 2
        // Predicated region
        $region45: #{tpu_custom_call.1} parent=43 // pred_check
          %p307 = pneg %p147
        $region46: #{tpu_custom_call.1} parent=43 // pred_check_branch
          %309 = sbr.rel (%p307) target = $region48
        $region47: #{tpu_custom_call.1} parent=43 // pred_region
          %s310 = sand.u32 %s132, 1
          %s311 = scalar_lea.sflag [#allocation6], %s310
          %s312 = sand.u32 %s132, 1
          %s313 = smul.addr %s312, 8
          %s314 = scalar_lea.vmem [#allocation7], %s313
          %315 = dma.done %s311, 128
        $region48: #{tpu_custom_call.1} parent=43 // pred_fallthru
          _
      $region44: #{tpu_custom_call.1} parent=5 // pred_fallthru
        _
    $region6: #{tpu_custom_call.1} parent=1 // loop_footer
      %s24 = sadd.s32 1, %s20
    $region7: #{tpu_custom_call.1} parent=1 // loop_footer_branch
      %19 = sbr.rel target = $region3
    $region8: #{tpu_custom_call.1} parent=1 // loop_exit
      _
    %316 = vsyncpa [#allocation5], 1
    %s317 = scalar_lea.sflag [#allocation5], 1
    %318 = vsyncpa %s317, 1
    %319 = vsyncpa [#allocation6], 1
    %s320 = scalar_lea.sflag [#allocation6], 1
    %321 = vsyncpa %s320, 1

</llo_original>
